<compile_context>
chip_gen: v7x
topology: tpu7x:2x2x1
jax: 0.10.0
libtpu: 0.0.40
codegen_flags: <defaults>
</compile_context>

<pallas_src>
import functools

import jax
import jax.numpy as jnp
from jax.experimental import pallas as pl
from jax.experimental.pallas import tpu as pltpu

# Module hyper-parameters (DistillKL.__init__(T, alpha, q)) — deterministic.
T = 4.0
INV_T = 1.0 / T
ALPHA = 0.7
Q = 0.5
LEAKY_SLOPE = 0.01   # nn.LeakyReLU() default
EPS = 1e-12          # F.normalize default eps


def _distill_kl_kernel(ys_ref, yt_ref, kl_ref, ql_ref):
    ys = ys_ref[...].astype(jnp.float32)
    yt = yt_ref[...].astype(jnp.float32)

    def normalize_leaky(x):
        # F.normalize(x, p=2, dim=1, eps=1e-12) == x / max(||x||_2, eps).
        # rsqrt of the sum of squares clamped at eps^2 == one EUP op instead
        # of sqrt + divide (clamp on the squared norm preserves the semantics).
        ssq = jnp.sum(x * x, axis=1, keepdims=True)
        x = x * jax.lax.rsqrt(jnp.maximum(ssq, EPS * EPS))
        return jnp.where(x >= 0.0, x, LEAKY_SLOPE * x)   # nn.LeakyReLU()

    ys = normalize_leaky(ys)
    yt = normalize_leaky(yt)

    zs = ys * INV_T
    zt = yt * INV_T

    # Student log-softmax.
    zs_c = zs - jnp.max(zs, axis=1, keepdims=True)
    log_p_s = zs_c - jnp.log(jnp.sum(jnp.exp(zs_c), axis=1, keepdims=True))

    # Teacher softmax: one exp / logsumexp pass shared by p_t and log_p_t
    # (no log(p_t) pass, no 0*log(0) NaN hazard, no full-tensor divide).
    zt_c = zt - jnp.max(zt, axis=1, keepdims=True)
    et = jnp.exp(zt_c)
    sum_et = jnp.sum(et, axis=1, keepdims=True)
    p_t = et * pl.reciprocal(sum_et, approx=True)
    log_p_t = zt_c - jnp.log(sum_et)

    # Unscaled partial sums for this row tile; T^2/N, 1/(N*C) and the alpha
    # mix are applied once in the wrapper.
    kl_part = jnp.sum(p_t * (log_p_t - log_p_s))
    err = ys - yt
    ql_part = jnp.sum(jnp.maximum(Q * err, (Q - 1.0) * err))

    # Lane-dense (1, 8, 128) splat per tile; wrapper reads [:, 0, 0].
    kl_ref[...] = jnp.broadcast_to(kl_part, kl_ref.shape).astype(jnp.float32)
    ql_ref[...] = jnp.broadcast_to(ql_part, ql_ref.shape).astype(jnp.float32)


def _round_up(x, m):
    return ((x + m - 1) // m) * m


def distill_kl(y_s, y_t, block_rows=None):
    assert y_s.shape == y_t.shape and y_s.ndim == 2
    n, c = y_s.shape

    if block_rows is None:
        # ~4 MiB of f32 per input block: 2 inputs x 2 pipeline buffers stays
        # under v7x's default scoped-VMEM limit while being large enough to
        # amortize the ~0.35 us per-step overhead on v5e/v6e.
        rows_4mib = ((4 * 1024 * 1024) // 4) // max(c, 1)
        block_rows = max(8, min(1024, (rows_4mib // 8) * 8))
    block_rows = max(8, (block_rows // 8) * 8)
    block_rows = min(block_rows, _round_up(n, 8))

    # Zero-pad rows so the grid divides evenly; zero rows contribute exactly 0
    # to both partial sums.
    n_pad = _round_up(n, block_rows)
    if n_pad != n:
        pad = ((0, n_pad - n), (0, 0))
        y_s = jnp.pad(y_s, pad)
        y_t = jnp.pad(y_t, pad)
    g = n_pad // block_rows

    kl_parts, ql_parts = pl.pallas_call(
        _distill_kl_kernel,
        grid=(g,),
        in_specs=[
            pl.BlockSpec((block_rows, c), lambda i: (i, 0)),
            pl.BlockSpec((block_rows, c), lambda i: (i, 0)),
        ],
        out_specs=(
            pl.BlockSpec((1, 8, 128), lambda i: (i, 0, 0)),
            pl.BlockSpec((1, 8, 128), lambda i: (i, 0, 0)),
        ),
        out_shape=(
            jax.ShapeDtypeStruct((g, 8, 128), jnp.float32),
            jax.ShapeDtypeStruct((g, 8, 128), jnp.float32),
        ),
        compiler_params=pltpu.CompilerParams(
            dimension_semantics=("parallel",)),
    )(y_s, y_t)

    # Tiny cross-tile reduction + final scaling (scalar math, done once).
    kl_sum = jnp.sum(kl_parts[:, 0, 0])
    ql_sum = jnp.sum(ql_parts[:, 0, 0])
    kl_loss = kl_sum * (T * T) / n          # F.kl_div(..., sum) * T^2 / N
    ql_mean = ql_sum / (n * c)              # mean over all N*C elements
    return ALPHA * kl_loss + (1.0 - ALPHA) * ql_mean


if __name__ == "__main__":
    key = jax.random.PRNGKey(0)
    k1, k2 = jax.random.split(key)
    N, C = 8, 16  # small logits: batch=8, classes=16
    y_s = jax.random.normal(k1, (N, C), dtype=jnp.float32)
    y_t = jax.random.normal(k2, (N, C), dtype=jnp.float32)

    loss = distill_kl(y_s, y_t)
    jax.block_until_ready(loss)
    assert jnp.isfinite(loss)
    print("KERNEL_OK")
</pallas_src>

<mosaic_0001>
module attributes {stable_mosaic.version = 11 : i64} {
  func.func @_distill_kl_kernel(%arg0: i32, %arg1: memref<8x16xf32, #tpu.memory_space<vmem>>, %arg2: memref<8x16xf32, #tpu.memory_space<vmem>>, %arg3: memref<1x8x128xf32, #tpu.memory_space<vmem>>, %arg4: memref<1x8x128xf32, #tpu.memory_space<vmem>>) attributes {dimension_semantics = [#tpu.dimension_semantics<parallel>], iteration_bounds = array<i64: 1>, scalar_prefetch = 0 : i64, scratch_operands = 0 : i64, tpu.core_type = #tpu.core_type<tc>, window_params = [{transform_indices = @transform_0, window_bounds = array<i64: 8, 16>}, {transform_indices = @transform_1, window_bounds = array<i64: 8, 16>}, {transform_indices = @transform_2, window_bounds = array<i64: 1, 8, 128>}, {transform_indices = @transform_3, window_bounds = array<i64: 1, 8, 128>}]} {
    %c0 = arith.constant 0 : index
    %c0_0 = arith.constant 0 : index
    %0 = vector.load %arg1[%c0, %c0_0] : memref<8x16xf32, #tpu.memory_space<vmem>>, vector<8x16xf32>
    %c0_1 = arith.constant 0 : index
    %c0_2 = arith.constant 0 : index
    %1 = vector.load %arg2[%c0_1, %c0_2] : memref<8x16xf32, #tpu.memory_space<vmem>>, vector<8x16xf32>
    %2 = arith.mulf %0, %0 : vector<8x16xf32>
    %cst = arith.constant dense<0.000000e+00> : vector<8xf32>
    %3 = vector.multi_reduction <add>, %2, %cst [1] : vector<8x16xf32> to vector<8xf32>
    %4 = vector.shape_cast %3 : vector<8xf32> to vector<8x1xf32>
    %cst_3 = arith.constant 1.000000e-24 : f32
    %5 = vector.broadcast %cst_3 : f32 to vector<8x1xf32>
    %6 = arith.maximumf %4, %5 : vector<8x1xf32>
    %7 = math.rsqrt %6 : vector<8x1xf32>
    %8 = vector.broadcast %7 : vector<8x1xf32> to vector<8x16xf32>
    %9 = arith.mulf %0, %8 : vector<8x16xf32>
    %cst_4 = arith.constant 0.000000e+00 : f32
    %10 = vector.broadcast %cst_4 : f32 to vector<8x16xf32>
    %11 = arith.cmpf oge, %9, %10 : vector<8x16xf32>
    %cst_5 = arith.constant 0.00999999977 : f32
    %12 = vector.broadcast %cst_5 : f32 to vector<8x16xf32>
    %13 = arith.mulf %12, %9 : vector<8x16xf32>
    %14 = arith.select %11, %9, %13 : vector<8x16xi1>, vector<8x16xf32>
    %15 = arith.mulf %1, %1 : vector<8x16xf32>
    %cst_6 = arith.constant dense<0.000000e+00> : vector<8xf32>
    %16 = vector.multi_reduction <add>, %15, %cst_6 [1] : vector<8x16xf32> to vector<8xf32>
    %17 = vector.shape_cast %16 : vector<8xf32> to vector<8x1xf32>
    %cst_7 = arith.constant 1.000000e-24 : f32
    %18 = vector.broadcast %cst_7 : f32 to vector<8x1xf32>
    %19 = arith.maximumf %17, %18 : vector<8x1xf32>
    %20 = math.rsqrt %19 : vector<8x1xf32>
    %21 = vector.broadcast %20 : vector<8x1xf32> to vector<8x16xf32>
    %22 = arith.mulf %1, %21 : vector<8x16xf32>
    %cst_8 = arith.constant 0.000000e+00 : f32
    %23 = vector.broadcast %cst_8 : f32 to vector<8x16xf32>
    %24 = arith.cmpf oge, %22, %23 : vector<8x16xf32>
    %cst_9 = arith.constant 0.00999999977 : f32
    %25 = vector.broadcast %cst_9 : f32 to vector<8x16xf32>
    %26 = arith.mulf %25, %22 : vector<8x16xf32>
    %27 = arith.select %24, %22, %26 : vector<8x16xi1>, vector<8x16xf32>
    %cst_10 = arith.constant 2.500000e-01 : f32
    %28 = vector.broadcast %cst_10 : f32 to vector<8x16xf32>
    %29 = arith.mulf %14, %28 : vector<8x16xf32>
    %cst_11 = arith.constant 2.500000e-01 : f32
    %30 = vector.broadcast %cst_11 : f32 to vector<8x16xf32>
    %31 = arith.mulf %27, %30 : vector<8x16xf32>
    %cst_12 = arith.constant dense<0xFF800000> : vector<8xf32>
    %32 = vector.multi_reduction <maximumf>, %29, %cst_12 [1] : vector<8x16xf32> to vector<8xf32>
    %33 = vector.shape_cast %32 : vector<8xf32> to vector<8x1xf32>
    %34 = vector.broadcast %33 : vector<8x1xf32> to vector<8x16xf32>
    %35 = arith.subf %29, %34 : vector<8x16xf32>
    %36 = math.exp %35 : vector<8x16xf32>
    %cst_13 = arith.constant dense<0.000000e+00> : vector<8xf32>
    %37 = vector.multi_reduction <add>, %36, %cst_13 [1] : vector<8x16xf32> to vector<8xf32>
    %38 = vector.shape_cast %37 : vector<8xf32> to vector<8x1xf32>
    %39 = math.log %38 : vector<8x1xf32>
    %40 = vector.broadcast %39 : vector<8x1xf32> to vector<8x16xf32>
    %41 = arith.subf %35, %40 : vector<8x16xf32>
    %cst_14 = arith.constant dense<0xFF800000> : vector<8xf32>
    %42 = vector.multi_reduction <maximumf>, %31, %cst_14 [1] : vector<8x16xf32> to vector<8xf32>
    %43 = vector.shape_cast %42 : vector<8xf32> to vector<8x1xf32>
    %44 = vector.broadcast %43 : vector<8x1xf32> to vector<8x16xf32>
    %45 = arith.subf %31, %44 : vector<8x16xf32>
    %46 = math.exp %45 : vector<8x16xf32>
    %cst_15 = arith.constant dense<0.000000e+00> : vector<8xf32>
    %47 = vector.multi_reduction <add>, %46, %cst_15 [1] : vector<8x16xf32> to vector<8xf32>
    %48 = vector.shape_cast %47 : vector<8xf32> to vector<8x1xf32>
    %49 = tpu.reciprocal %48 {approx = true} : vector<8x1xf32> -> vector<8x1xf32>
    %50 = vector.broadcast %49 : vector<8x1xf32> to vector<8x16xf32>
    %51 = arith.mulf %46, %50 : vector<8x16xf32>
    %52 = math.log %48 : vector<8x1xf32>
    %53 = vector.broadcast %52 : vector<8x1xf32> to vector<8x16xf32>
    %54 = arith.subf %45, %53 : vector<8x16xf32>
    %55 = arith.subf %54, %41 : vector<8x16xf32>
    %56 = arith.mulf %51, %55 : vector<8x16xf32>
    %57 = vector.shape_cast %56 : vector<8x16xf32> to vector<1x8x16xf32>
    %cst_16 = arith.constant dense<0.000000e+00> : vector<1xf32>
    %58 = vector.multi_reduction <add>, %57, %cst_16 [1, 2] : vector<1x8x16xf32> to vector<1xf32>
    %59 = vector.shape_cast %58 : vector<1xf32> to vector<1x1x1xf32>
    %60 = vector.extract %59[0, 0, 0] : f32 from vector<1x1x1xf32>
    %61 = arith.subf %14, %27 : vector<8x16xf32>
    %cst_17 = arith.constant 5.000000e-01 : f32
    %62 = vector.broadcast %cst_17 : f32 to vector<8x16xf32>
    %63 = arith.mulf %62, %61 : vector<8x16xf32>
    %cst_18 = arith.constant -5.000000e-01 : f32
    %64 = vector.broadcast %cst_18 : f32 to vector<8x16xf32>
    %65 = arith.mulf %64, %61 : vector<8x16xf32>
    %66 = arith.maximumf %63, %65 : vector<8x16xf32>
    %67 = vector.shape_cast %66 : vector<8x16xf32> to vector<1x8x16xf32>
    %cst_19 = arith.constant dense<0.000000e+00> : vector<1xf32>
    %68 = vector.multi_reduction <add>, %67, %cst_19 [1, 2] : vector<1x8x16xf32> to vector<1xf32>
    %69 = vector.shape_cast %68 : vector<1xf32> to vector<1x1x1xf32>
    %70 = vector.extract %69[0, 0, 0] : f32 from vector<1x1x1xf32>
    %71 = vector.broadcast %60 : f32 to vector<1x8x128xf32>
    %c0_20 = arith.constant 0 : index
    %c0_21 = arith.constant 0 : index
    %c0_22 = arith.constant 0 : index
    %72 = vector.load %arg3[%c0_20, %c0_21, %c0_22] : memref<1x8x128xf32, #tpu.memory_space<vmem>>, vector<1x8x128xf32>
    tpu.vector_store %arg3[%c0_20, %c0_21, %c0_22], %71 {strides = array<i32>} : memref<1x8x128xf32, #tpu.memory_space<vmem>>, vector<1x8x128xf32>,
    %73 = vector.broadcast %70 : f32 to vector<1x8x128xf32>
    %c0_23 = arith.constant 0 : index
    %c0_24 = arith.constant 0 : index
    %c0_25 = arith.constant 0 : index
    %74 = vector.load %arg4[%c0_23, %c0_24, %c0_25] : memref<1x8x128xf32, #tpu.memory_space<vmem>>, vector<1x8x128xf32>
    tpu.vector_store %arg4[%c0_23, %c0_24, %c0_25], %73 {strides = array<i32>} : memref<1x8x128xf32, #tpu.memory_space<vmem>>, vector<1x8x128xf32>,
    return
  }
  func.func @transform_0(%arg0: i32) -> (i32, i32) {
    %c0_i32 = arith.constant 0 : i32
    %c0_i32_0 = arith.constant 0 : i32
    return %arg0, %c0_i32 : i32, i32
  }
  func.func @transform_1(%arg0: i32) -> (i32, i32) {
    %c0_i32 = arith.constant 0 : i32
    %c0_i32_0 = arith.constant 0 : i32
    return %arg0, %c0_i32 : i32, i32
  }
  func.func @transform_2(%arg0: i32) -> (i32, i32, i32) {
    %c0_i32 = arith.constant 0 : i32
    %c0_i32_0 = arith.constant 0 : i32
    %c0_i32_1 = arith.constant 0 : i32
    return %arg0, %c0_i32, %c0_i32_0 : i32, i32, i32
  }
  func.func @transform_3(%arg0: i32) -> (i32, i32, i32) {
    %c0_i32 = arith.constant 0 : i32
    %c0_i32_0 = arith.constant 0 : i32
    %c0_i32_1 = arith.constant 0 : i32
    return %arg0, %c0_i32, %c0_i32_0 : i32, i32, i32
  }
}

</mosaic_0001>

<llo_original>
// kernel: tpu_custom_call.1
$region0: #{tpu_custom_call.1}
  #allocation0 [shape = 'u32[]', space=smem, size = 0x4, offset = 0x4, fixed_abs, tag = 'smem constant byte address 0x4 - core index']
  #allocation1 [shape = 'u32[144,128]{1,0:T(1,128)}', space=vmem, size = 0x12000, scoped, tag = 'internal scratch']
  %s0 = inlined_call_operand.hbm [shape: f32[8,16], index: 0, kind: input, shape index: {}]
  %s1 = inlined_call_operand.hbm [shape: f32[8,16], index: 1, kind: input, shape index: {}]
  %s2 = inlined_call_operand.hbm [shape: f32[1,8,128], index: 2, kind: output, shape index: {0}]
  %s3 = inlined_call_operand.hbm [shape: f32[1,8,128], index: 3, kind: output, shape index: {1}]
  %4 = xla_tuple %s2, %s3
  %s5 = sld [smem:[#allocation0]]
  $region34: #{tpu_custom_call.1} parent=0
    _
  %s7 = ssub.s32 1, %s5
  %s8 = scalar_select 0, %s7, %s5
  $region1: #{tpu_custom_call.1} parent=0
    #allocation2 [shape = 'u8[4096]{0}', space=vmem, size = 0x1000, scoped, tag = 'input window, operand 0, single buffered']
    #allocation3 [shape = 's32[1]{0}', space=sflag, size = 0x4, scoped, tag = 'scoped memory for tpu_custom_call.1']
    #allocation4 [shape = 's32[1]{0}', space=sflag, size = 0x4, scoped, tag = 'scoped memory for tpu_custom_call.1']
    #allocation5 [shape = 'u8[4096]{0}', space=vmem, size = 0x1000, scoped, tag = 'input window, operand 1, single buffered']
    #allocation6 [shape = 's32[1]{0}', space=sflag, size = 0x4, scoped, tag = 'scoped memory for tpu_custom_call.1']
    #allocation7 [shape = 'u8[4096]{0}', space=vmem, size = 0x1000, scoped, tag = 'output window, operand 0, single buffered']
    #allocation8 [shape = 'u8[4096]{0}', space=vmem, size = 0x1000, scoped, tag = 'output window, operand 1, single buffered']
    #allocation9 [shape = 's32[1]{0}', space=sflag, size = 0x4, scoped, tag = 'scoped memory for tpu_custom_call.1']
    %9 = vsyncpa [#allocation3], 0
    %10 = vsyncpa [#allocation6], 0
    %11 = vsyncpa [#allocation4], 0
    %12 = vsyncpa [#allocation9], 0
    // Predicated region
    $region2: #{tpu_custom_call.1} parent=1 // pred_check
      _
    $region3: #{tpu_custom_call.1} parent=1 // pred_check_branch
      %14 = sbr.rel (0) target = $region5
    $region4: #{tpu_custom_call.1} parent=1 // pred_region
      %s16 = ssub.s32 128, 128
      %17 = vsyncadd [#allocation3], %s16
      %s19 = sshll.u32 [#allocation2], 4
      %s20 = int_to_ptr.vmem [resolvable:$true] %s19
      %22 = dma.hbm_to_vmem [thread:$0]  %s0, 128, %s20, [#allocation3]
    $region5: #{tpu_custom_call.1} parent=1 // pred_fallthru
      _
    // Predicated region
    $region6: #{tpu_custom_call.1} parent=1 // pred_check
      _
    $region7: #{tpu_custom_call.1} parent=1 // pred_check_branch
      %24 = sbr.rel (0) target = $region9
    $region8: #{tpu_custom_call.1} parent=1 // pred_region
      %s26 = ssub.s32 128, 128
      %27 = vsyncadd [#allocation6], %s26
      %s29 = sshll.u32 [#allocation5], 4
      %s30 = int_to_ptr.vmem [resolvable:$true] %s29
      %32 = dma.hbm_to_vmem [thread:$0]  %s1, 128, %s30, [#allocation6]
    $region9: #{tpu_custom_call.1} parent=1 // pred_fallthru
      _
    // Predicated region
    $region10: #{tpu_custom_call.1} parent=1 // pred_check
      _
    $region11: #{tpu_custom_call.1} parent=1 // pred_check_branch
      %34 = sbr.rel (0) target = $region13
    $region12: #{tpu_custom_call.1} parent=1 // pred_region
      %35 = dma.done [#allocation3], 128
    $region13: #{tpu_custom_call.1} parent=1 // pred_fallthru
      _
    // Predicated region
    $region14: #{tpu_custom_call.1} parent=1 // pred_check
      _
    $region15: #{tpu_custom_call.1} parent=1 // pred_check_branch
      %37 = sbr.rel (0) target = $region17
    $region16: #{tpu_custom_call.1} parent=1 // pred_region
      %38 = dma.done [#allocation6], 128
    $region17: #{tpu_custom_call.1} parent=1 // pred_fallthru
      _
    %v39 = vld [vmem:[#allocation2] sm:$0xff]
    %v40 = vld [vmem:[#allocation5] sm:$0xff]
    %v41 = vmul.f32 %v39, %v39
    %vm42 = vcmask 130048
    %v43 = vsel %vm42, %v41, 0.0
    %44 = vadd.xlane.f32.xlu0 %v43
    %v45 = vpop.xlane.xlu0 %44
    %v46 = vmax.f32 %v45, 1e-24
    %v47 = vrsqrt.pop %v46
    %v48 = vmul.f32 %v39, %v47
    %vm49 = vcmp.ge.f32.partialorder %v48, 0.0
    %v50 = vmul.f32 %v48, 0.01
    %v51 = vsel %vm49, %v48, %v50
    %v52 = vmul.f32 %v40, %v40
    %v53 = vsel %vm42, %v52, 0.0
    %54 = vadd.xlane.f32.xlu0 %v53
    %v55 = vpop.xlane.xlu0 %54
    %v56 = vmax.f32 %v55, 1e-24
    %v57 = vrsqrt.pop %v56
    %v58 = vmul.f32 %v40, %v57
    %vm59 = vcmp.ge.f32.partialorder %v58, 0.0
    %v60 = vmul.f32 %v58, 0.01
    %v61 = vsel %vm59, %v58, %v60
    %v62 = vmul.f32 %v51, 0.25
    %v63 = vmul.f32 %v61, 0.25
    %v64 = vsel %vm42, %v62, -inf
    %65 = vmax.xlane.f32.xlu0 %v64
    %v66 = vpop.xlane.xlu0 %65
    %v67 = vsub.f32 %v62, %v66
    %v68 = vmul.f32 %v67, 1.442695
    %v69 = vpow.pop %v68
    %v70 = vsel %vm42, %v69, 0.0
    %71 = vadd.xlane.f32.xlu0 %v70
    %v72 = vpop.xlane.xlu0 %71
    %v73 = vlog2.pop %v72
    %v74 = vmul.f32 %v73, 0.6931472
    %v75 = vsub.f32 %v67, %v74
    %v76 = vsel %vm42, %v63, -inf
    %77 = vmax.xlane.f32.xlu0 %v76
    %v78 = vpop.xlane.xlu0 %77
    %v79 = vsub.f32 %v63, %v78
    %v80 = vmul.f32 %v79, 1.442695
    %v81 = vpow.pop %v80
    %v82 = vsel %vm42, %v81, 0.0
    %83 = vadd.xlane.f32.xlu0 %v82
    %v84 = vpop.xlane.xlu0 %83
    %v85 = vrcp.pop %v84
    %v86 = vmul.f32 %v81, %v85
    %v87 = vlog2.pop %v84
    %v88 = vmul.f32 %v87, 0.6931472
    %v89 = vsub.f32 %v79, %v88
    %v90 = vsub.f32 %v89, %v75
    %v91 = vmul.f32 %v86, %v90
    %v92 = vsel %vm42, %v91, 0.0
    %93 = vadd.xlane.f32.xlu0 %v92
    %v94 = vpop.xlane.xlu0 %93
    %v95 = vrot.slane %v94, 4
    %v96 = vadd.f32 %v94, %v95
    %v97 = vrot.slane %v96, 2
    %v98 = vadd.f32 %v96, %v97
    %v99 = vrot.slane %v98, 1
    %v100 = vadd.f32 %v98, %v99
    %s101 = vtos %v100
    %v102 = vsub.f32 %v51, %v61
    %v103 = vmul.f32 %v102, 0.5
    %v104 = vmul.f32 %v102, -0.5
    %v105 = vmax.f32 %v103, %v104
    %v106 = vsel %vm42, %v105, 0.0
    %107 = vadd.xlane.f32.xlu0 %v106
    %v108 = vpop.xlane.xlu0 %107
    %v109 = vrot.slane %v108, 4
    %v110 = vadd.f32 %v108, %v109
    %v111 = vrot.slane %v110, 2
    %v112 = vadd.f32 %v110, %v111
    %v113 = vrot.slane %v112, 1
    %v114 = vadd.f32 %v112, %v113
    %s115 = vtos %v114
    %v116 = vstv %s101
    %117 = vst [vmem:[#allocation7] sm:$0xff] %v116
    %v118 = vstv %s115
    %119 = vst [vmem:[#allocation8] sm:$0xff] %v118
    // Predicated region
    $region18: #{tpu_custom_call.1} parent=1 // pred_check
      _
    $region19: #{tpu_custom_call.1} parent=1 // pred_check_branch
      %121 = sbr.rel (0) target = $region21
    $region20: #{tpu_custom_call.1} parent=1 // pred_region
      %s123 = ssub.s32 128, 128
      %124 = vsyncadd [#allocation4], %s123
      %s126 = sshll.u32 [#allocation7], 4
      %s127 = int_to_ptr.vmem [resolvable:$true] %s126
      %129 = dma.vmem_to_hbm [thread:$0]  %s127, 128, %s2, [#allocation4]
    $region21: #{tpu_custom_call.1} parent=1 // pred_fallthru
      _
    // Predicated region
    $region22: #{tpu_custom_call.1} parent=1 // pred_check
      _
    $region23: #{tpu_custom_call.1} parent=1 // pred_check_branch
      %131 = sbr.rel (0) target = $region25
    $region24: #{tpu_custom_call.1} parent=1 // pred_region
      %s133 = ssub.s32 128, 128
      %134 = vsyncadd [#allocation9], %s133
      %s136 = sshll.u32 [#allocation8], 4
      %s137 = int_to_ptr.vmem [resolvable:$true] %s136
      %139 = dma.vmem_to_hbm [thread:$0]  %s137, 128, %s3, [#allocation9]
    $region25: #{tpu_custom_call.1} parent=1 // pred_fallthru
      _
    // Predicated region
    $region26: #{tpu_custom_call.1} parent=1 // pred_check
      _
    $region27: #{tpu_custom_call.1} parent=1 // pred_check_branch
      %141 = sbr.rel (0) target = $region29
    $region28: #{tpu_custom_call.1} parent=1 // pred_region
      %142 = dma.done [#allocation4], 128
    $region29: #{tpu_custom_call.1} parent=1 // pred_fallthru
      _
    // Predicated region
    $region30: #{tpu_custom_call.1} parent=1 // pred_check
      _
    $region31: #{tpu_custom_call.1} parent=1 // pred_check_branch
      %144 = sbr.rel (0) target = $region33
    $region32: #{tpu_custom_call.1} parent=1 // pred_region
      %145 = dma.done [#allocation9], 128
    $region33: #{tpu_custom_call.1} parent=1 // pred_fallthru
      _
    %146 = vsyncpa [#allocation3], 1
    %147 = vsyncpa [#allocation6], 1
    %148 = vsyncpa [#allocation4], 1
    %149 = vsyncpa [#allocation9], 1

</llo_original>
